<compile_context>
chip_gen: v5e
topology: v5e:2x2
jax: 0.10.0
libtpu: 0.0.40
codegen_flags: <defaults>
</compile_context>

<pallas_src>
import math

import jax
import jax.numpy as jnp
from jax import lax
from jax.experimental import pallas as pl
from jax.experimental.pallas import tpu as pltpu


def _sinusoidal_kernel(x_ref, out_ref):
    # x_ref:   (1, TB)   float32 — timesteps on the lane axis
    # out_ref: (dim, TB) — rows [0:half) = sin(phase), rows [half:dim) = cos(phase)
    dim = out_ref.shape[0]            # static Python ints
    half = dim // 2
    tb = x_ref.shape[1]
    neg_scale = -math.log(10000.0) / (half - 1)

    # Frequencies rebuilt in-kernel (no operand / double buffer / HBM fetch).
    # Full-tile iota keeps all shapes (half, TB)-regular; exp goes to the
    # otherwise-idle EUP slot, so the per-tile redundancy is free.
    k = lax.broadcasted_iota(jnp.int32, (half, tb), 0).astype(jnp.float32)
    freqs = jnp.exp(k * neg_scale)                         # (half, TB)
    phase = freqs * x_ref[...]                             # (1,TB) bcast over sublanes

    # Lane-dense stores (batch on lanes); static sublane slices are free views,
    # no concatenate, no masked partial stores.
    out_ref[:half, :] = jnp.sin(phase).astype(out_ref.dtype)
    out_ref[half:, :] = jnp.cos(phase).astype(out_ref.dtype)


def _round_up(a: int, m: int) -> int:
    return (a + m - 1) // m * m


def sinusoidal_pos_emb(x: jax.Array, dim: int, *,
                       out_dtype=jnp.float32,
                       transpose_output: bool = True) -> jax.Array:
    """Pallas TPU implementation of SinusoidalPosEmb.forward.

    Args:
      x:                (B,) timesteps.
      dim:              embedding dimension (even, >= 4).
      out_dtype:        output dtype (float32 matches PyTorch; bf16 halves writeback).
      transpose_output: if True (default) return (B, dim) to match PyTorch;
                        if False return the kernel's lane-dense (dim, B) layout
                        and skip the wrapper transpose.

    Returns:
      (B, dim) embedding (or (dim, B) if transpose_output=False), [sin | cos].
    """
    assert x.ndim == 1, "x is a 1-D batch of scalar timesteps"
    assert dim % 2 == 0 and dim >= 4, "dim must be even and >= 4 (half_dim - 1 > 0)"

    B = x.shape[0]
    LANE = 128
    itemsize = jnp.dtype(out_dtype).itemsize

    # --- batch-tile sizing (batch lives on the lane axis) --------------------
    # Per lane-column, double-buffered: out = 2*dim*itemsize bytes; the (1, TB)
    # x block pads to 8 sublanes -> 2*8*4 bytes. Keep the total under ~12 MiB
    # so it fits every generation's scoped-VMEM default with headroom.
    vmem_budget = 12 * 1024 * 1024
    bytes_per_col = 2 * dim * itemsize + 2 * 8 * 4
    tb_cap = max(LANE, (vmem_budget // bytes_per_col) // LANE * LANE)

    Bp0 = _round_up(B, LANE)
    TB = min(tb_cap, Bp0)
    # v7x has 2 TensorCores: when the batch allows it, use >= 2 grid steps so
    # the "parallel" batch axis actually has something to shard (no-op v5e/v6e).
    if Bp0 >= 2 * LANE and TB >= Bp0:
        TB = _round_up(pl.cdiv(Bp0, 2), LANE)
    Bp = _round_up(B, TB)

    # Pad the batch (padded columns compute finite values; sliced off after).
    x_row = x.astype(jnp.float32)
    if Bp != B:
        x_row = jnp.pad(x_row, (0, Bp - B))
    x_row = x_row.reshape(1, Bp)

    out_t = pl.pallas_call(
        _sinusoidal_kernel,
        out_shape=jax.ShapeDtypeStruct((dim, Bp), out_dtype),
        grid=(Bp // TB,),
        in_specs=[
            pl.BlockSpec((1, TB), lambda i: (0, i)),        # x: lane-contiguous row
        ],
        out_specs=pl.BlockSpec((dim, TB), lambda i: (0, i)),  # lane-dense output
        compiler_params=pltpu.CompilerParams(
            dimension_semantics=("parallel",),   # shard batch tiles across v7x's 2 TCs
            vmem_limit_bytes=32 * 1024 * 1024,   # safe on v5e/v6e/v7x; tiles sized << this
        ),
    )(x_row)

    if not transpose_output:
        return out_t[:, :B] if Bp != B else out_t            # (dim, B), lane-dense
    out = out_t.T                                             # (Bp, dim)
    return out[:B] if Bp != B else out


def _reference(x: jax.Array, dim: int) -> jax.Array:
    half_dim = dim // 2
    scale = math.log(10000.0) / (half_dim - 1)
    freqs = jnp.exp(jnp.arange(half_dim, dtype=jnp.float32) * -scale)
    emb = x[:, None] * freqs[None, :]
    return jnp.concatenate([jnp.sin(emb), jnp.cos(emb)], axis=-1)


if __name__ == "__main__":
    key = jax.random.PRNGKey(0)
    B, DIM = 8, 32  # small shapes consistent with the module's use as a time embedding
    x = jax.random.uniform(key, (B,), dtype=jnp.float32, minval=0.0, maxval=100.0)

    out = jax.block_until_ready(sinusoidal_pos_emb(x, DIM))
    ref = _reference(x, DIM)
    assert out.shape == (B, DIM)
    assert jnp.allclose(out, ref, atol=1e-4, rtol=1e-4), "f32 mismatch vs reference"

    # Ragged batch (not a multiple of the 128-lane tile) + smaller dim.
    x2 = jax.random.uniform(jax.random.PRNGKey(1), (13,), dtype=jnp.float32,
                            minval=0.0, maxval=100.0)
    out2 = jax.block_until_ready(sinusoidal_pos_emb(x2, 16))
    assert out2.shape == (13, 16)
    assert jnp.allclose(out2, _reference(x2, 16), atol=1e-4, rtol=1e-4)

    # Lane-dense (dim, B) path (no wrapper transpose).
    out3 = jax.block_until_ready(sinusoidal_pos_emb(x, DIM, transpose_output=False))
    assert out3.shape == (DIM, B)
    assert jnp.allclose(out3.T, ref, atol=1e-4, rtol=1e-4)

    # bf16 output path (halved writeback; loosest on v5e's HBM).
    out4 = jax.block_until_ready(sinusoidal_pos_emb(x, DIM, out_dtype=jnp.bfloat16))
    assert out4.shape == (B, DIM)
    assert jnp.allclose(out4.astype(jnp.float32), ref, atol=2e-2, rtol=2e-2)

    print("KERNEL_OK")
</pallas_src>

<mosaic_0001>
module attributes {stable_mosaic.version = 11 : i64} {
  func.func @_sinusoidal_kernel(%arg0: i32, %arg1: memref<1x128xf32, #tpu.memory_space<vmem>>, %arg2: memref<32x128xf32, #tpu.memory_space<vmem>>) attributes {dimension_semantics = [#tpu.dimension_semantics<parallel>], iteration_bounds = array<i64: 1>, scalar_prefetch = 0 : i64, scratch_operands = 0 : i64, tpu.core_type = #tpu.core_type<tc>, window_params = [{transform_indices = @transform_0, window_bounds = array<i64: 1, 128>}, {transform_indices = @transform_1, window_bounds = array<i64: 32, 128>}]} {
    %0 = tpu.iota {dimensions = array<i32: 0>} : vector<16x128xi32>
    %1 = arith.sitofp %0 : vector<16x128xi32> to vector<16x128xf32>
    %cst = arith.constant -0.614022672 : f32
    %2 = vector.broadcast %cst : f32 to vector<16x128xf32>
    %3 = arith.mulf %1, %2 : vector<16x128xf32>
    %4 = math.exp %3 : vector<16x128xf32>
    %c0 = arith.constant 0 : index
    %c0_0 = arith.constant 0 : index
    %5 = vector.load %arg1[%c0, %c0_0] : memref<1x128xf32, #tpu.memory_space<vmem>>, vector<1x128xf32>
    %6 = vector.broadcast %5 : vector<1x128xf32> to vector<16x128xf32>
    %7 = arith.mulf %4, %6 : vector<16x128xf32>
    %8 = math.sin %7 : vector<16x128xf32>
    %c0_1 = arith.constant 0 : index
    %c0_2 = arith.constant 0 : index
    %9 = vector.load %arg2[%c0_1, %c0_2] : memref<32x128xf32, #tpu.memory_space<vmem>>, vector<16x128xf32>
    tpu.vector_store %arg2[%c0_1, %c0_2], %8 {strides = array<i32>} : memref<32x128xf32, #tpu.memory_space<vmem>>, vector<16x128xf32>,
    %10 = math.cos %7 : vector<16x128xf32>
    %c16 = arith.constant 16 : index
    %c0_3 = arith.constant 0 : index
    %11 = vector.load %arg2[%c16, %c0_3] : memref<32x128xf32, #tpu.memory_space<vmem>>, vector<16x128xf32>
    tpu.vector_store %arg2[%c16, %c0_3], %10 {strides = array<i32>} : memref<32x128xf32, #tpu.memory_space<vmem>>, vector<16x128xf32>,
    return
  }
  func.func @transform_0(%arg0: i32) -> (i32, i32) {
    %c0_i32 = arith.constant 0 : i32
    %c0_i32_0 = arith.constant 0 : i32
    return %c0_i32, %arg0 : i32, i32
  }
  func.func @transform_1(%arg0: i32) -> (i32, i32) {
    %c0_i32 = arith.constant 0 : i32
    %c0_i32_0 = arith.constant 0 : i32
    return %c0_i32, %arg0 : i32, i32
  }
}

</mosaic_0001>

<llo_original>
// kernel: tpu_custom_call.1
$region0: #{tpu_custom_call.1}
  #allocation0 [shape = 'u32[]', space=smem, size = 0x4, offset = 0x4, fixed_abs, tag = 'smem constant byte address 0x4 - core index']
  #allocation1 [shape = 'u32[72,128]{1,0:T(1,128)}', space=vmem, size = 0x9000, scoped, tag = 'internal scratch']
  %s0 = inlined_call_operand.hbm [shape: f32[1,128], index: 0, kind: input, shape index: {}]
  %s1 = inlined_call_operand.hbm [shape: f32[32,128], index: 1, kind: output, shape index: {}]
  %s2 = sld [smem:[#allocation0]]
  $region18: #{tpu_custom_call.1} parent=0
    _
  %s4 = ssub.s32 1, %s2
  %s5 = scalar_select 0, %s4, %s2
  $region1: #{tpu_custom_call.1} parent=0
    #allocation2 [shape = 'u8[512]{0}', space=vmem, size = 0x400, scoped, tag = 'input window, operand 0, single buffered']
    #allocation3 [shape = 's32[1]{0}', space=sflag, size = 0x4, scoped, tag = 'scoped memory for tpu_custom_call.1']
    #allocation4 [shape = 's32[1]{0}', space=sflag, size = 0x4, scoped, tag = 'scoped memory for tpu_custom_call.1']
    #allocation5 [shape = 'u8[16384]{0}', space=vmem, size = 0x4000, scoped, tag = 'output window, operand 0, single buffered']
    %6 = vsyncpa [#allocation3], 0
    %7 = vsyncpa [#allocation4], 0
    // Predicated region
    $region2: #{tpu_custom_call.1} parent=1 // pred_check
      _
    $region3: #{tpu_custom_call.1} parent=1 // pred_check_branch
      %9 = sbr.rel (0) target = $region5
    $region4: #{tpu_custom_call.1} parent=1 // pred_region
      %11 = vsyncadd [#allocation3], 0
      %s13 = sshll.u32 %s0, 4
      %s14 = int_to_ptr.hbm [resolvable:$true] %s13
      %s15 = sshll.u32 [#allocation2], 4
      %s16 = int_to_ptr.vmem [resolvable:$true] %s15
      %18 = dma.hbm_to_vmem [thread:$0]  %s14, 16, %s16, [#allocation3]
    $region5: #{tpu_custom_call.1} parent=1 // pred_fallthru
      _
    // Predicated region
    $region6: #{tpu_custom_call.1} parent=1 // pred_check
      _
    $region7: #{tpu_custom_call.1} parent=1 // pred_check_branch
      %20 = sbr.rel (0) target = $region9
    $region8: #{tpu_custom_call.1} parent=1 // pred_region
      %22 = dma.done [#allocation3], 16
    $region9: #{tpu_custom_call.1} parent=1 // pred_fallthru
      _
    %v23 = vlaneseq
    %v24 = vshrl.u32 %v23, 7
    %v25 = vadd.s32 %v24, 8
    %v26 = vcvt.s32.f32 %v24
    %v27 = vcvt.s32.f32 %v25
    %v28 = vmul.f32 %v26, -0.6140227
    %v29 = vmul.f32 %v27, -0.6140227
    %v30 = vmul.f32 %v28, 1.442695
    %v31 = vpow.pop %v30
    %v32 = vmul.f32 %v29, 1.442695
    %v33 = vpow.pop %v32
    %v34 = vld [vmem:[#allocation2] sm:$0x1]
    %v36 = vperm.slane %v34, 0
    %v38 = vmul.f32 %v31, %v36
    %v39 = vmul.f32 %v33, %v36
    %v40 = vand.u32 2147483647, %v38
    %vm41 = vcmp.le.f32.partialorder %v40, 0.7853982
    %vm42 = vcmp.lt.s32.totalorder %v38, 0
    %v43 = vand.u32 %v38, 2139095040
    %v44 = vshrl.u32 %v43, 23
    %v45 = vsub.s32 %v44, 127
    %v46 = vand.u32 2147483647, %v38
    %v47 = vand.u32 %v46, 8388607
    %v48 = vor.u32 %v47, 8388608
    %v49 = vsub.s32 0, %v48
    %v50 = vadd.s32 %v45, 1
    %vm51 = vcmp.gt.s32.totalorder %v50, 0
    %v52 = vsel %vm51, %v50, 0
    %v53 = vshrl.u32 %v52, 5
    %v54 = vand.u32 %v52, 31
    %v55 = vsub.s32 32, %v54
    %v56 = vshrl.u32 683565275, %v55
    %v57 = vshll.u32 683565275, %v54
    %v58 = vshrl.u32 2475754826, %v55
    %v59 = vor.u32 %v57, %v58
    %v60 = vshll.u32 2475754826, %v54
    %v61 = vshrl.u32 2131351028, %v55
    %v62 = vor.u32 %v60, %v61
    %v63 = vshll.u32 2131351028, %v54
    %v64 = vshrl.u32 2102212464, %v55
    %v65 = vor.u32 %v63, %v64
    %v66 = vshll.u32 2102212464, %v54
    %v67 = vshrl.u32 920167782, %v55
    %v68 = vor.u32 %v66, %v67
    %v69 = vshll.u32 920167782, %v54
    %v70 = vshrl.u32 1326507024, %v55
    %v71 = vor.u32 %v69, %v70
    %vm72 = vcmp.lt.s32.totalorder %v53, 1
    %vm73 = vcmp.lt.s32.totalorder %v53, 2
    %vm74 = vcmp.lt.s32.totalorder %v53, 3
    %vm75 = vcmp.lt.s32.totalorder %v53, 4
    %v76 = vsel %vm72, %v56, %v59
    %v77 = vsel %vm75, %v65, 2102212464
    %v78 = vsel %vm74, %v62, %v77
    %v79 = vsel %vm73, %v76, %v78
    %v80 = vsel %vm72, %v59, %v62
    %v81 = vsel %vm75, %v68, 920167782
    %v82 = vsel %vm74, %v65, %v81
    %v83 = vsel %vm73, %v80, %v82
    %v84 = vsel %vm72, %v62, %v65
    %v85 = vsel %vm75, %v71, 1326507024
    %v86 = vsel %vm74, %v68, %v85
    %v87 = vsel %vm73, %v84, %v86
    %v88 = vshll.u32 %v48, 8
    %v89 = vand.u32 %v88, 65535
    %v90 = vshrl.u32 %v88, 16
    %v91 = vand.u32 %v87, 65535
    %v92 = vshrl.u32 %v87, 16
    %v93 = vmul.u32 %v89, %v91
    %v94 = vmul.u32 %v89, %v92
    %v95 = vmul.u32 %v90, %v91
    %v96 = vmul.u32 %v90, %v92
    %v97 = vshll.u32 %v94, 16
    %v98 = vshrl.u32 %v94, 16
    %v99 = vshll.u32 %v95, 16
    %v100 = vshrl.u32 %v95, 16
    %vm101 = vc.u32 %v93, %v97
    %v102 = vsel %vm101, 1, 0
    %v103 = vadd.s32 %v93, %v97
    %v104 = vadd.s32 %v96, %v102
    %vm105 = vc.u32 %v103, %v99
    %v106 = vsel %vm105, 1, 0
    %v107 = vadd.s32 %v103, %v99
    %v108 = vadd.s32 %v104, %v106
    %v109 = vadd.s32 %v108, %v98
    %v110 = vadd.s32 %v109, %v100
    %v111 = vand.u32 %v88, 65535
    %v112 = vshrl.u32 %v88, 16
    %v113 = vand.u32 %v83, 65535
    %v114 = vshrl.u32 %v83, 16
    %v115 = vmul.u32 %v111, %v113
    %v116 = vmul.u32 %v111, %v114
    %v117 = vmul.u32 %v112, %v113
    %v118 = vmul.u32 %v112, %v114
    %v119 = vshll.u32 %v116, 16
    %v120 = vshrl.u32 %v116, 16
    %v121 = vshll.u32 %v117, 16
    %v122 = vshrl.u32 %v117, 16
    %vm123 = vc.u32 %v115, %v119
    %v124 = vsel %vm123, 1, 0
    %v125 = vadd.s32 %v115, %v119
    %v126 = vadd.s32 %v118, %v124
    %vm127 = vc.u32 %v125, %v121
    %v128 = vsel %vm127, 1, 0
    %v129 = vadd.s32 %v125, %v121
    %v130 = vadd.s32 %v126, %v128
    %v131 = vadd.s32 %v130, %v120
    %v132 = vadd.s32 %v131, %v122
    %v133 = vmul.u32 %v88, %v79
    %v134 = vadd.s32 %v110, %v129
    %vm135 = vc.u32 %v110, %v129
    %v136 = vadd.s32 %v132, 1
    %v137 = vsel %vm135, %v136, %v132
    %v138 = vadd.s32 %v133, %v137
    %v139 = vadd.s32 %v138, 536870912
    %v140 = vshrl.u32 %v139, 30
    %v141 = vshll.u32 %v140, 30
    %v142 = vsub.s32 %v138, %v141
    %vm143 = vcmp.lt.s32.totalorder %v142, 0
    %v144 = vsub.s32 0, %v142
    %v145 = vsel %vm143, %v144, %v142
    %v146 = vclz %v145
    %v147 = vsub.s32 %v146, 2
    %vm148 = vcmp.gt.s32.totalorder 0, %v147
    %v149 = vsel %vm148, 0, %v147
    %v150 = vsub.s32 32, %v149
    %v151 = vshll.u32 %v142, %v149
    %v152 = vshrl.u32 %v134, %v150
    %v153 = vor.u32 %v151, %v152
    %v154 = vsub.s32 4294967266, %v149
    %v155 = vadd.s32 %v154, 127
    %v156 = vshll.u32 %v155, 23
    %v157 = vor.u32 4788187, %v156
    %v158 = vand.u32 2147483647, %v157
    %v160 = vcvt.s32.f32 %v153
    %v161 = vmul.f32 %v160, %v158
    %v162 = vxor.u32 %v161, 2147483648
    %v163 = vsel %vm42, %v162, %v161
    %v164 = vsub.s32 4, %v140
    %v165 = vsel %vm42, %v164, %v140
    %v166 = vsel %vm41, %v38, %v163
    %v167 = vsel %vm41, 0, %v165
    %v168 = vmul.f32 %v166, %v166
    %v169 = vmul.f32 %v168, -0.001358992
    %v170 = vadd.f32 %v169, 0.041655596
    %v171 = vmul.f32 %v168, %v170
    %v172 = vadd.f32 %v171, -0.4999988
    %v173 = vmul.f32 %v168, %v172
    %v174 = vadd.f32 1.0, %v173
    %v175 = vmul.f32 %v166, %v166
    %v176 = vmul.f32 %v175, -0.00019511016
    %v177 = vadd.f32 %v176, 0.008332121
    %v178 = vmul.f32 %v175, %v177
    %v179 = vadd.f32 %v178, -0.16666654
    %v180 = vmul.f32 %v175, %v179
    %v181 = vadd.f32 %v180, 1.0
    %v182 = vmul.f32 %v181, %v166
    %vm183 = vweird.f32 %v38
    %v184 = vadd.s32 %v167, 3
    %v185 = vand.u32 %v184, 3
    %vm186 = vcmp.lt.s32.totalorder %v185, 2
    %vm187 = vcmp.eq.s32.totalorder %v185, 0
    %v188 = vxor.u32 %v182, 2147483648
    %v189 = vsel %vm187, %v174, %v188
    %vm190 = vcmp.eq.s32.totalorder %v185, 2
    %v191 = vxor.u32 %v174, 2147483648
    %v192 = vsel %vm190, %v191, %v182
    %v193 = vsel %vm186, %v189, %v192
    %v194 = vsel %vm183, nan, %v193
    %v195 = vand.u32 2147483647, %v39
    %vm196 = vcmp.le.f32.partialorder %v195, 0.7853982
    %vm197 = vcmp.lt.s32.totalorder %v39, 0
    %v198 = vand.u32 %v39, 2139095040
    %v199 = vshrl.u32 %v198, 23
    %v200 = vsub.s32 %v199, 127
    %v201 = vand.u32 2147483647, %v39
    %v202 = vand.u32 %v201, 8388607
    %v203 = vor.u32 %v202, 8388608
    %v204 = vsub.s32 0, %v203
    %v205 = vadd.s32 %v200, 1
    %vm206 = vcmp.gt.s32.totalorder %v205, 0
    %v207 = vsel %vm206, %v205, 0
    %v208 = vshrl.u32 %v207, 5
    %v209 = vand.u32 %v207, 31
    %v210 = vsub.s32 32, %v209
    %v211 = vshrl.u32 683565275, %v210
    %v212 = vshll.u32 683565275, %v209
    %v213 = vshrl.u32 2475754826, %v210
    %v214 = vor.u32 %v212, %v213
    %v215 = vshll.u32 2475754826, %v209
    %v216 = vshrl.u32 2131351028, %v210
    %v217 = vor.u32 %v215, %v216
    %v218 = vshll.u32 2131351028, %v209
    %v219 = vshrl.u32 2102212464, %v210
    %v220 = vor.u32 %v218, %v219
    %v221 = vshll.u32 2102212464, %v209
    %v222 = vshrl.u32 920167782, %v210
    %v223 = vor.u32 %v221, %v222
    %v224 = vshll.u32 920167782, %v209
    %v225 = vshrl.u32 1326507024, %v210
    %v226 = vor.u32 %v224, %v225
    %vm227 = vcmp.lt.s32.totalorder %v208, 1
    %vm228 = vcmp.lt.s32.totalorder %v208, 2
    %vm229 = vcmp.lt.s32.totalorder %v208, 3
    %vm230 = vcmp.lt.s32.totalorder %v208, 4
    %v231 = vsel %vm227, %v211, %v214
    %v232 = vsel %vm230, %v220, 2102212464
    %v233 = vsel %vm229, %v217, %v232
    %v234 = vsel %vm228, %v231, %v233
    %v235 = vsel %vm227, %v214, %v217
    %v236 = vsel %vm230, %v223, 920167782
    %v237 = vsel %vm229, %v220, %v236
    %v238 = vsel %vm228, %v235, %v237
    %v239 = vsel %vm227, %v217, %v220
    %v240 = vsel %vm230, %v226, 1326507024
    %v241 = vsel %vm229, %v223, %v240
    %v242 = vsel %vm228, %v239, %v241
    %v243 = vshll.u32 %v203, 8
    %v244 = vand.u32 %v243, 65535
    %v245 = vshrl.u32 %v243, 16
    %v246 = vand.u32 %v242, 65535
    %v247 = vshrl.u32 %v242, 16
    %v248 = vmul.u32 %v244, %v246
    %v249 = vmul.u32 %v244, %v247
    %v250 = vmul.u32 %v245, %v246
    %v251 = vmul.u32 %v245, %v247
    %v252 = vshll.u32 %v249, 16
    %v253 = vshrl.u32 %v249, 16
    %v254 = vshll.u32 %v250, 16
    %v255 = vshrl.u32 %v250, 16
    %vm256 = vc.u32 %v248, %v252
    %v257 = vsel %vm256, 1, 0
    %v258 = vadd.s32 %v248, %v252
    %v259 = vadd.s32 %v251, %v257
    %vm260 = vc.u32 %v258, %v254
    %v261 = vsel %vm260, 1, 0
    %v262 = vadd.s32 %v258, %v254
    %v263 = vadd.s32 %v259, %v261
    %v264 = vadd.s32 %v263, %v253
    %v265 = vadd.s32 %v264, %v255
    %v266 = vand.u32 %v243, 65535
    %v267 = vshrl.u32 %v243, 16
    %v268 = vand.u32 %v238, 65535
    %v269 = vshrl.u32 %v238, 16
    %v270 = vmul.u32 %v266, %v268
    %v271 = vmul.u32 %v266, %v269
    %v272 = vmul.u32 %v267, %v268
    %v273 = vmul.u32 %v267, %v269
    %v274 = vshll.u32 %v271, 16
    %v275 = vshrl.u32 %v271, 16
    %v276 = vshll.u32 %v272, 16
    %v277 = vshrl.u32 %v272, 16
    %vm278 = vc.u32 %v270, %v274
    %v279 = vsel %vm278, 1, 0
    %v280 = vadd.s32 %v270, %v274
    %v281 = vadd.s32 %v273, %v279
    %vm282 = vc.u32 %v280, %v276
    %v283 = vsel %vm282, 1, 0
    %v284 = vadd.s32 %v280, %v276
    %v285 = vadd.s32 %v281, %v283
    %v286 = vadd.s32 %v285, %v275
    %v287 = vadd.s32 %v286, %v277
    %v288 = vmul.u32 %v243, %v234
    %v289 = vadd.s32 %v265, %v284
    %vm290 = vc.u32 %v265, %v284
    %v291 = vadd.s32 %v287, 1
    %v292 = vsel %vm290, %v291, %v287
    %v293 = vadd.s32 %v288, %v292
    %v294 = vadd.s32 %v293, 536870912
    %v295 = vshrl.u32 %v294, 30
    %v296 = vshll.u32 %v295, 30
    %v297 = vsub.s32 %v293, %v296
    %vm298 = vcmp.lt.s32.totalorder %v297, 0
    %v299 = vsub.s32 0, %v297
    %v300 = vsel %vm298, %v299, %v297
    %v301 = vclz %v300
    %v302 = vsub.s32 %v301, 2
    %vm303 = vcmp.gt.s32.totalorder 0, %v302
    %v304 = vsel %vm303, 0, %v302
    %v305 = vsub.s32 32, %v304
    %v306 = vshll.u32 %v297, %v304
    %v307 = vshrl.u32 %v289, %v305
    %v308 = vor.u32 %v306, %v307
    %v309 = vsub.s32 4294967266, %v304
    %v310 = vadd.s32 %v309, 127
    %v311 = vshll.u32 %v310, 23
    %v312 = vor.u32 4788187, %v311
    %v313 = vand.u32 2147483647, %v312
    %v315 = vcvt.s32.f32 %v308
    %v316 = vmul.f32 %v315, %v313
    %v317 = vxor.u32 %v316, 2147483648
    %v318 = vsel %vm197, %v317, %v316
    %v319 = vsub.s32 4, %v295
    %v320 = vsel %vm197, %v319, %v295
    %v321 = vsel %vm196, %v39, %v318
    %v322 = vsel %vm196, 0, %v320
    %v323 = vmul.f32 %v321, %v321
    %v324 = vmul.f32 %v323, -0.001358992
    %v325 = vadd.f32 %v324, 0.041655596
    %v326 = vmul.f32 %v323, %v325
    %v327 = vadd.f32 %v326, -0.4999988
    %v328 = vmul.f32 %v323, %v327
    %v329 = vadd.f32 1.0, %v328
    %v330 = vmul.f32 %v321, %v321
    %v331 = vmul.f32 %v330, -0.00019511016
    %v332 = vadd.f32 %v331, 0.008332121
    %v333 = vmul.f32 %v330, %v332
    %v334 = vadd.f32 %v333, -0.16666654
    %v335 = vmul.f32 %v330, %v334
    %v336 = vadd.f32 %v335, 1.0
    %v337 = vmul.f32 %v336, %v321
    %vm338 = vweird.f32 %v39
    %v339 = vadd.s32 %v322, 3
    %v340 = vand.u32 %v339, 3
    %vm341 = vcmp.lt.s32.totalorder %v340, 2
    %vm342 = vcmp.eq.s32.totalorder %v340, 0
    %v343 = vxor.u32 %v337, 2147483648
    %v344 = vsel %vm342, %v329, %v343
    %vm345 = vcmp.eq.s32.totalorder %v340, 2
    %v346 = vxor.u32 %v329, 2147483648
    %v347 = vsel %vm345, %v346, %v337
    %v348 = vsel %vm341, %v344, %v347
    %v349 = vsel %vm338, nan, %v348
    %350 = vst [vmem:[#allocation5] sm:$0xff] %v194
    %351 = vst [vmem:[#allocation5 + $0x8] sm:$0xff] %v349
    %v352 = vand.u32 2147483647, %v38
    %vm353 = vcmp.le.f32.partialorder %v352, 0.7853982
    %vm354 = vcmp.lt.s32.totalorder %v38, 0
    %v355 = vand.u32 %v38, 2139095040
    %v356 = vshrl.u32 %v355, 23
    %v357 = vsub.s32 %v356, 127
    %v358 = vand.u32 2147483647, %v38
    %v359 = vand.u32 %v358, 8388607
    %v360 = vor.u32 %v359, 8388608
    %v361 = vsub.s32 0, %v360
    %v362 = vadd.s32 %v357, 1
    %vm363 = vcmp.gt.s32.totalorder %v362, 0
    %v364 = vsel %vm363, %v362, 0
    %v365 = vshrl.u32 %v364, 5
    %v366 = vand.u32 %v364, 31
    %v367 = vsub.s32 32, %v366
    %v368 = vshrl.u32 683565275, %v367
    %v369 = vshll.u32 683565275, %v366
    %v370 = vshrl.u32 2475754826, %v367
    %v371 = vor.u32 %v369, %v370
    %v372 = vshll.u32 2475754826, %v366
    %v373 = vshrl.u32 2131351028, %v367
    %v374 = vor.u32 %v372, %v373
    %v375 = vshll.u32 2131351028, %v366
    %v376 = vshrl.u32 2102212464, %v367
    %v377 = vor.u32 %v375, %v376
    %v378 = vshll.u32 2102212464, %v366
    %v379 = vshrl.u32 920167782, %v367
    %v380 = vor.u32 %v378, %v379
    %v381 = vshll.u32 920167782, %v366
    %v382 = vshrl.u32 1326507024, %v367
    %v383 = vor.u32 %v381, %v382
    %vm384 = vcmp.lt.s32.totalorder %v365, 1
    %vm385 = vcmp.lt.s32.totalorder %v365, 2
    %vm386 = vcmp.lt.s32.totalorder %v365, 3
    %vm387 = vcmp.lt.s32.totalorder %v365, 4
    %v388 = vsel %vm384, %v368, %v371
    %v389 = vsel %vm387, %v377, 2102212464
    %v390 = vsel %vm386, %v374, %v389
    %v391 = vsel %vm385, %v388, %v390
    %v392 = vsel %vm384, %v371, %v374
    %v393 = vsel %vm387, %v380, 920167782
    %v394 = vsel %vm386, %v377, %v393
    %v395 = vsel %vm385, %v392, %v394
    %v396 = vsel %vm384, %v374, %v377
    %v397 = vsel %vm387, %v383, 1326507024
    %v398 = vsel %vm386, %v380, %v397
    %v399 = vsel %vm385, %v396, %v398
    %v400 = vshll.u32 %v360, 8
    %v401 = vand.u32 %v400, 65535
    %v402 = vshrl.u32 %v400, 16
    %v403 = vand.u32 %v399, 65535
    %v404 = vshrl.u32 %v399, 16
    %v405 = vmul.u32 %v401, %v403
    %v406 = vmul.u32 %v401, %v404
    %v407 = vmul.u32 %v402, %v403
    %v408 = vmul.u32 %v402, %v404
    %v409 = vshll.u32 %v406, 16
    %v410 = vshrl.u32 %v406, 16
    %v411 = vshll.u32 %v407, 16
    %v412 = vshrl.u32 %v407, 16
    %vm413 = vc.u32 %v405, %v409
    %v414 = vsel %vm413, 1, 0
    %v415 = vadd.s32 %v405, %v409
    %v416 = vadd.s32 %v408, %v414
    %vm417 = vc.u32 %v415, %v411
    %v418 = vsel %vm417, 1, 0
    %v419 = vadd.s32 %v415, %v411
    %v420 = vadd.s32 %v416, %v418
    %v421 = vadd.s32 %v420, %v410
    %v422 = vadd.s32 %v421, %v412
    %v423 = vand.u32 %v400, 65535
    %v424 = vshrl.u32 %v400, 16
    %v425 = vand.u32 %v395, 65535
    %v426 = vshrl.u32 %v395, 16
    %v427 = vmul.u32 %v423, %v425
    %v428 = vmul.u32 %v423, %v426
    %v429 = vmul.u32 %v424, %v425
    %v430 = vmul.u32 %v424, %v426
    %v431 = vshll.u32 %v428, 16
    %v432 = vshrl.u32 %v428, 16
    %v433 = vshll.u32 %v429, 16
    %v434 = vshrl.u32 %v429, 16
    %vm435 = vc.u32 %v427, %v431
    %v436 = vsel %vm435, 1, 0
    %v437 = vadd.s32 %v427, %v431
    %v438 = vadd.s32 %v430, %v436
    %vm439 = vc.u32 %v437, %v433
    %v440 = vsel %vm439, 1, 0
    %v441 = vadd.s32 %v437, %v433
    %v442 = vadd.s32 %v438, %v440
    %v443 = vadd.s32 %v442, %v432
    %v444 = vadd.s32 %v443, %v434
    %v445 = vmul.u32 %v400, %v391
    %v446 = vadd.s32 %v422, %v441
    %vm447 = vc.u32 %v422, %v441
    %v448 = vadd.s32 %v444, 1
    %v449 = vsel %vm447, %v448, %v444
    %v450 = vadd.s32 %v445, %v449
    %v451 = vadd.s32 %v450, 536870912
    %v452 = vshrl.u32 %v451, 30
    %v453 = vshll.u32 %v452, 30
    %v454 = vsub.s32 %v450, %v453
    %vm455 = vcmp.lt.s32.totalorder %v454, 0
    %v456 = vsub.s32 0, %v454
    %v457 = vsel %vm455, %v456, %v454
    %v458 = vclz %v457
    %v459 = vsub.s32 %v458, 2
    %vm460 = vcmp.gt.s32.totalorder 0, %v459
    %v461 = vsel %vm460, 0, %v459
    %v462 = vsub.s32 32, %v461
    %v463 = vshll.u32 %v454, %v461
    %v464 = vshrl.u32 %v446, %v462
    %v465 = vor.u32 %v463, %v464
    %v466 = vsub.s32 4294967266, %v461
    %v467 = vadd.s32 %v466, 127
    %v468 = vshll.u32 %v467, 23
    %v469 = vor.u32 4788187, %v468
    %v470 = vand.u32 2147483647, %v469
    %v472 = vcvt.s32.f32 %v465
    %v473 = vmul.f32 %v472, %v470
    %v474 = vxor.u32 %v473, 2147483648
    %v475 = vsel %vm354, %v474, %v473
    %v476 = vsub.s32 4, %v452
    %v477 = vsel %vm354, %v476, %v452
    %v478 = vsel %vm353, %v38, %v475
    %v479 = vsel %vm353, 0, %v477
    %v480 = vmul.f32 %v478, %v478
    %v481 = vmul.f32 %v480, -0.001358992
    %v482 = vadd.f32 %v481, 0.041655596
    %v483 = vmul.f32 %v480, %v482
    %v484 = vadd.f32 %v483, -0.4999988
    %v485 = vmul.f32 %v480, %v484
    %v486 = vadd.f32 1.0, %v485
    %v487 = vmul.f32 %v478, %v478
    %v488 = vmul.f32 %v487, -0.00019511016
    %v489 = vadd.f32 %v488, 0.008332121
    %v490 = vmul.f32 %v487, %v489
    %v491 = vadd.f32 %v490, -0.16666654
    %v492 = vmul.f32 %v487, %v491
    %v493 = vadd.f32 %v492, 1.0
    %v494 = vmul.f32 %v493, %v478
    %vm495 = vweird.f32 %v38
    %v496 = vand.u32 %v479, 3
    %vm497 = vcmp.lt.s32.totalorder %v496, 2
    %vm498 = vcmp.eq.s32.totalorder %v496, 0
    %v499 = vxor.u32 %v494, 2147483648
    %v500 = vsel %vm498, %v486, %v499
    %vm501 = vcmp.eq.s32.totalorder %v496, 2
    %v502 = vxor.u32 %v486, 2147483648
    %v503 = vsel %vm501, %v502, %v494
    %v504 = vsel %vm497, %v500, %v503
    %v505 = vsel %vm495, nan, %v504
    %v506 = vand.u32 2147483647, %v39
    %vm507 = vcmp.le.f32.partialorder %v506, 0.7853982
    %vm508 = vcmp.lt.s32.totalorder %v39, 0
    %v509 = vand.u32 %v39, 2139095040
    %v510 = vshrl.u32 %v509, 23
    %v511 = vsub.s32 %v510, 127
    %v512 = vand.u32 2147483647, %v39
    %v513 = vand.u32 %v512, 8388607
    %v514 = vor.u32 %v513, 8388608
    %v515 = vsub.s32 0, %v514
    %v516 = vadd.s32 %v511, 1
    %vm517 = vcmp.gt.s32.totalorder %v516, 0
    %v518 = vsel %vm517, %v516, 0
    %v519 = vshrl.u32 %v518, 5
    %v520 = vand.u32 %v518, 31
    %v521 = vsub.s32 32, %v520
    %v522 = vshrl.u32 683565275, %v521
    %v523 = vshll.u32 683565275, %v520
    %v524 = vshrl.u32 2475754826, %v521
    %v525 = vor.u32 %v523, %v524
    %v526 = vshll.u32 2475754826, %v520
    %v527 = vshrl.u32 2131351028, %v521
    %v528 = vor.u32 %v526, %v527
    %v529 = vshll.u32 2131351028, %v520
    %v530 = vshrl.u32 2102212464, %v521
    %v531 = vor.u32 %v529, %v530
    %v532 = vshll.u32 2102212464, %v520
    %v533 = vshrl.u32 920167782, %v521
    %v534 = vor.u32 %v532, %v533
    %v535 = vshll.u32 920167782, %v520
    %v536 = vshrl.u32 1326507024, %v521
    %v537 = vor.u32 %v535, %v536
    %vm538 = vcmp.lt.s32.totalorder %v519, 1
    %vm539 = vcmp.lt.s32.totalorder %v519, 2
    %vm540 = vcmp.lt.s32.totalorder %v519, 3
    %vm541 = vcmp.lt.s32.totalorder %v519, 4
    %v542 = vsel %vm538, %v522, %v525
    %v543 = vsel %vm541, %v531, 2102212464
    %v544 = vsel %vm540, %v528, %v543
    %v545 = vsel %vm539, %v542, %v544
    %v546 = vsel %vm538, %v525, %v528
    %v547 = vsel %vm541, %v534, 920167782
    %v548 = vsel %vm540, %v531, %v547
    %v549 = vsel %vm539, %v546, %v548
    %v550 = vsel %vm538, %v528, %v531
    %v551 = vsel %vm541, %v537, 1326507024
    %v552 = vsel %vm540, %v534, %v551
    %v553 = vsel %vm539, %v550, %v552
    %v554 = vshll.u32 %v514, 8
    %v555 = vand.u32 %v554, 65535
    %v556 = vshrl.u32 %v554, 16
    %v557 = vand.u32 %v553, 65535
    %v558 = vshrl.u32 %v553, 16
    %v559 = vmul.u32 %v555, %v557
    %v560 = vmul.u32 %v555, %v558
    %v561 = vmul.u32 %v556, %v557
    %v562 = vmul.u32 %v556, %v558
    %v563 = vshll.u32 %v560, 16
    %v564 = vshrl.u32 %v560, 16
    %v565 = vshll.u32 %v561, 16
    %v566 = vshrl.u32 %v561, 16
    %vm567 = vc.u32 %v559, %v563
    %v568 = vsel %vm567, 1, 0
    %v569 = vadd.s32 %v559, %v563
    %v570 = vadd.s32 %v562, %v568
    %vm571 = vc.u32 %v569, %v565
    %v572 = vsel %vm571, 1, 0
    %v573 = vadd.s32 %v569, %v565
    %v574 = vadd.s32 %v570, %v572
    %v575 = vadd.s32 %v574, %v564
    %v576 = vadd.s32 %v575, %v566
    %v577 = vand.u32 %v554, 65535
    %v578 = vshrl.u32 %v554, 16
    %v579 = vand.u32 %v549, 65535
    %v580 = vshrl.u32 %v549, 16
    %v581 = vmul.u32 %v577, %v579
    %v582 = vmul.u32 %v577, %v580
    %v583 = vmul.u32 %v578, %v579
    %v584 = vmul.u32 %v578, %v580
    %v585 = vshll.u32 %v582, 16
    %v586 = vshrl.u32 %v582, 16
    %v587 = vshll.u32 %v583, 16
    %v588 = vshrl.u32 %v583, 16
    %vm589 = vc.u32 %v581, %v585
    %v590 = vsel %vm589, 1, 0
    %v591 = vadd.s32 %v581, %v585
    %v592 = vadd.s32 %v584, %v590
    %vm593 = vc.u32 %v591, %v587
    %v594 = vsel %vm593, 1, 0
    %v595 = vadd.s32 %v591, %v587
    %v596 = vadd.s32 %v592, %v594
    %v597 = vadd.s32 %v596, %v586
    %v598 = vadd.s32 %v597, %v588
    %v599 = vmul.u32 %v554, %v545
    %v600 = vadd.s32 %v576, %v595
    %vm601 = vc.u32 %v576, %v595
    %v602 = vadd.s32 %v598, 1
    %v603 = vsel %vm601, %v602, %v598
    %v604 = vadd.s32 %v599, %v603
    %v605 = vadd.s32 %v604, 536870912
    %v606 = vshrl.u32 %v605, 30
    %v607 = vshll.u32 %v606, 30
    %v608 = vsub.s32 %v604, %v607
    %vm609 = vcmp.lt.s32.totalorder %v608, 0
    %v610 = vsub.s32 0, %v608
    %v611 = vsel %vm609, %v610, %v608
    %v612 = vclz %v611
    %v613 = vsub.s32 %v612, 2
    %vm614 = vcmp.gt.s32.totalorder 0, %v613
    %v615 = vsel %vm614, 0, %v613
    %v616 = vsub.s32 32, %v615
    %v617 = vshll.u32 %v608, %v615
    %v618 = vshrl.u32 %v600, %v616
    %v619 = vor.u32 %v617, %v618
    %v620 = vsub.s32 4294967266, %v615
    %v621 = vadd.s32 %v620, 127
    %v622 = vshll.u32 %v621, 23
    %v623 = vor.u32 4788187, %v622
    %v624 = vand.u32 2147483647, %v623
    %v626 = vcvt.s32.f32 %v619
    %v627 = vmul.f32 %v626, %v624
    %v628 = vxor.u32 %v627, 2147483648
    %v629 = vsel %vm508, %v628, %v627
    %v630 = vsub.s32 4, %v606
    %v631 = vsel %vm508, %v630, %v606
    %v632 = vsel %vm507, %v39, %v629
    %v633 = vsel %vm507, 0, %v631
    %v634 = vmul.f32 %v632, %v632
    %v635 = vmul.f32 %v634, -0.001358992
    %v636 = vadd.f32 %v635, 0.041655596
    %v637 = vmul.f32 %v634, %v636
    %v638 = vadd.f32 %v637, -0.4999988
    %v639 = vmul.f32 %v634, %v638
    %v640 = vadd.f32 1.0, %v639
    %v641 = vmul.f32 %v632, %v632
    %v642 = vmul.f32 %v641, -0.00019511016
    %v643 = vadd.f32 %v642, 0.008332121
    %v644 = vmul.f32 %v641, %v643
    %v645 = vadd.f32 %v644, -0.16666654
    %v646 = vmul.f32 %v641, %v645
    %v647 = vadd.f32 %v646, 1.0
    %v648 = vmul.f32 %v647, %v632
    %vm649 = vweird.f32 %v39
    %v650 = vand.u32 %v633, 3
    %vm651 = vcmp.lt.s32.totalorder %v650, 2
    %vm652 = vcmp.eq.s32.totalorder %v650, 0
    %v653 = vxor.u32 %v648, 2147483648
    %v654 = vsel %vm652, %v640, %v653
    %vm655 = vcmp.eq.s32.totalorder %v650, 2
    %v656 = vxor.u32 %v640, 2147483648
    %v657 = vsel %vm655, %v656, %v648
    %v658 = vsel %vm651, %v654, %v657
    %v659 = vsel %vm649, nan, %v658
    %660 = vst [vmem:[#allocation5 + $0x10] sm:$0xff] %v505
    %661 = vst [vmem:[#allocation5 + $0x18] sm:$0xff] %v659
    // Predicated region
    $region10: #{tpu_custom_call.1} parent=1 // pred_check
      _
    $region11: #{tpu_custom_call.1} parent=1 // pred_check_branch
      %663 = sbr.rel (0) target = $region13
    $region12: #{tpu_custom_call.1} parent=1 // pred_region
      %665 = vsyncadd [#allocation4], 0
      %s666 = sshll.u32 [#allocation5], 4
      %s667 = int_to_ptr.vmem [resolvable:$true] %s666
      %s668 = sshll.u32 %s1, 4
      %s669 = int_to_ptr.hbm [resolvable:$true] %s668
      %674 = dma.vmem_to_hbm [thread:$0]  %s667, 512, %s669, [#allocation4], 128, 128, 8
    $region13: #{tpu_custom_call.1} parent=1 // pred_fallthru
      _
    // Predicated region
    $region14: #{tpu_custom_call.1} parent=1 // pred_check
      _
    $region15: #{tpu_custom_call.1} parent=1 // pred_check_branch
      %676 = sbr.rel (0) target = $region17
    $region16: #{tpu_custom_call.1} parent=1 // pred_region
      %678 = dma.done [#allocation4], 512
    $region17: #{tpu_custom_call.1} parent=1 // pred_fallthru
      _
    %679 = vsyncpa [#allocation3], 1
    %680 = vsyncpa [#allocation4], 1

</llo_original>
